<compile_context>
chip_gen: v7x
topology: tpu7x:2x2x1
jax: 0.10.0
libtpu: 0.0.40
codegen_flags: <defaults>
</compile_context>

<pallas_src>
import functools

import jax
import jax.numpy as jnp
from jax.experimental import pallas as pl
from jax.experimental.pallas import tpu as pltpu


def _gru_seq_kernel(use_sig,
                    x_ref, h0_ref,
                    wz0_ref, wz1_ref, wr0_ref, wr1_ref, wh0_ref, wh1_ref,
                    bz_ref, br_ref, bh_ref, wa_ref, ba_ref,
                    act_ref, hfin_ref,
                    h_scr):
    t = pl.program_id(1)

    # Initialize the recurrent carry at the first timestep of this batch chunk.
    @pl.when(t == 0)
    def _():
        h_scr[...] = h0_ref[...].astype(jnp.float32)

    hp = h_scr[...]                       # (Bc, D) f32 carry
    x = x_ref[0]                          # (Bc, D) current timestep

    # MXU operand dtype (f32 by default; bf16 if packed that way for v6e/v7x).
    mdt = wz0_ref.dtype
    xm = x.astype(mdt)
    hm = hp.astype(mdt)

    # update gate z = sigmoid(x@wz0 + h_p@wz1 + (bz0+bz1))
    z = jax.nn.sigmoid(
        jnp.dot(xm, wz0_ref[...], preferred_element_type=jnp.float32)
        + jnp.dot(hm, wz1_ref[...], preferred_element_type=jnp.float32)
        + bz_ref[...])

    # reset gate r = sigmoid(x@wr0 + h_p@wr1 + (br0+br1))
    r = jax.nn.sigmoid(
        jnp.dot(xm, wr0_ref[...], preferred_element_type=jnp.float32)
        + jnp.dot(hm, wr1_ref[...], preferred_element_type=jnp.float32)
        + br_ref[...])

    # candidate h_hat = tanh(x@wh0 + (h_p*r)@wh1 + (bh0+bh1))
    h_hat = jnp.tanh(
        jnp.dot(xm, wh0_ref[...], preferred_element_type=jnp.float32)
        + jnp.dot((hp * r).astype(mdt), wh1_ref[...],
                  preferred_element_type=jnp.float32)
        + bh_ref[...])

    # blended hidden state: (1-z)*hp + z*h_hat  ==  hp + z*(h_hat - hp)
    h = hp + z * (h_hat - hp)
    h_scr[...] = h

    # output head (0.5 already folded into wa/ba when use_sig)
    a = (jnp.dot(h.astype(mdt), wa_ref[...], preferred_element_type=jnp.float32)
         + ba_ref[...])
    if use_sig:
        a = jnp.tanh(a)   # (sigmoid(2a') - 0.5) * 2 == tanh(a'), bare EUP op

    act_ref[0] = a.astype(act_ref.dtype)
    hfin_ref[...] = h.astype(hfin_ref.dtype)   # resident over t; last write wins


def pack_params(p, activation=None, mxu_dtype=jnp.float32):
    """Pre-sum paired biases, fold the 'sig' 0.5 into wa/ba, cast MXU weights."""
    scale = 0.5 if activation == "sig" else 1.0
    packed = {
        "activation": activation,
        "wz0": p["wz0"].astype(mxu_dtype), "wz1": p["wz1"].astype(mxu_dtype),
        "wr0": p["wr0"].astype(mxu_dtype), "wr1": p["wr1"].astype(mxu_dtype),
        "wh0": p["wh0"].astype(mxu_dtype), "wh1": p["wh1"].astype(mxu_dtype),
        "bz": (p["bz0"] + p["bz1"]).astype(jnp.float32),
        "br": (p["br0"] + p["br1"]).astype(jnp.float32),
        "bh": (p["bh0"] + p["bh1"]).astype(jnp.float32),
        "wa": (p["wa"] * scale).astype(mxu_dtype),
        "ba": (p["ba"] * scale).astype(jnp.float32),
    }
    return packed


def gru_sequence(x_seq, h0, packed, num_batch_chunks=1):
    """Run a whole sequence in one pallas_call.

    x_seq: (T, B, D) f32, h0: (B, D) f32.
    Returns (actions (T, B, O), h_final (B, D)).
    """
    T, B, D = x_seq.shape
    O = packed["wa"].shape[1]
    NB = num_batch_chunks
    assert B % NB == 0, "batch must divide evenly into chunks"
    Bc = B // NB
    assert Bc == B or Bc % 8 == 0, "batch chunk must be full batch or multiple of 8"

    activation = packed["activation"]
    weights = (packed["wz0"], packed["wz1"], packed["wr0"], packed["wr1"],
               packed["wh0"], packed["wh1"],
               packed["bz"], packed["br"], packed["bh"],
               packed["wa"], packed["ba"])

    xmap = lambda b, t: (t, b, 0)    # streamed over T, chunked over batch
    bmap = lambda b, t: (b, 0)       # per batch chunk, constant over T
    cmap = lambda b, t: (0, 0)       # weights: DMA'd once, VMEM-resident

    in_specs = ([pl.BlockSpec((1, Bc, D), xmap),
                 pl.BlockSpec((Bc, D), bmap)]
                + [pl.BlockSpec(w.shape, cmap) for w in weights])
    out_specs = (pl.BlockSpec((1, Bc, O), xmap),
                 pl.BlockSpec((Bc, D), bmap))

    kernel = functools.partial(_gru_seq_kernel, activation == "sig")

    flops = 2 * T * B * D * (6 * D + O)                       # 7 matmuls / step
    transcendentals = T * B * (3 * D + (O if activation == "sig" else 0))
    bytes_accessed = 4 * (int(x_seq.size) + T * B * O + 2 * B * D) \
        + sum(int(w.size) * w.dtype.itemsize for w in weights)

    actions, h_final = pl.pallas_call(
        kernel,
        out_shape=(jax.ShapeDtypeStruct((T, B, O), jnp.float32),
                   jax.ShapeDtypeStruct((B, D), jnp.float32)),
        grid_spec=pltpu.PrefetchScalarGridSpec(
            num_scalar_prefetch=0,
            grid=(NB, T),
            in_specs=in_specs,
            out_specs=out_specs,
            scratch_shapes=[pltpu.VMEM((Bc, D), jnp.float32)]),
        compiler_params=pltpu.CompilerParams(
            dimension_semantics=("parallel", "arbitrary")),
        cost_estimate=pl.CostEstimate(
            flops=flops,
            transcendentals=transcendentals,
            bytes_accessed=bytes_accessed),
    )(x_seq, h0, *weights)
    return actions, h_final


def gru_forward(x, h_p, packed):
    """Single-step forward matching the PyTorch module: (action, h)."""
    actions, h = gru_sequence(x[None], h_p, packed)
    return actions[0], h


def generate_memory(memory_size, batch=None):
    shape = (memory_size,) if batch is None else (batch, memory_size)
    return jnp.zeros(shape, jnp.float32)


def init_params(key, input_size, output_size):
    """Deterministic init matching PyTorch nn.Linear shapes (stored transposed)."""
    def linear(k, fan_in, fan_out):
        kw, kb = jax.random.split(k)
        bound = 1.0 / jnp.sqrt(fan_in)
        w = jax.random.uniform(kw, (fan_in, fan_out), jnp.float32, -bound, bound)
        b = jax.random.uniform(kb, (1, fan_out), jnp.float32, -bound, bound)
        return w, b

    keys = jax.random.split(key, 7)
    p = {}
    p["wz0"], p["bz0"] = linear(keys[0], input_size, input_size)
    p["wz1"], p["bz1"] = linear(keys[1], input_size, input_size)
    p["wr0"], p["br0"] = linear(keys[2], input_size, input_size)
    p["wr1"], p["br1"] = linear(keys[3], input_size, input_size)
    p["wh0"], p["bh0"] = linear(keys[4], input_size, input_size)
    p["wh1"], p["bh1"] = linear(keys[5], input_size, input_size)
    p["wa"], p["ba"] = linear(keys[6], input_size, output_size)
    return p


def gru_cell_reference(x, h_p, p, activation=None):
    """Pure-JAX reference mirroring the PyTorch forward exactly (unfused)."""
    z = jax.nn.sigmoid(x @ p["wz0"] + p["bz0"] + h_p @ p["wz1"] + p["bz1"])
    r = jax.nn.sigmoid(x @ p["wr0"] + p["br0"] + h_p @ p["wr1"] + p["br1"])
    h_hat = jnp.tanh(x @ p["wh0"] + p["bh0"] + (h_p * r) @ p["wh1"] + p["bh1"])
    h = (1.0 - z) * h_p + z * h_hat
    action = h @ p["wa"] + p["ba"]
    if activation == "sig":
        action = (jax.nn.sigmoid(action) - 0.5) * 2.0
    return action, h


def gru_sequence_reference(x_seq, h0, p, activation=None):
    def step(h, x):
        a, hn = gru_cell_reference(x, h, p, activation)
        return hn, a
    h_final, actions = jax.lax.scan(step, h0, x_seq)
    return actions, h_final


if __name__ == "__main__":
    B = 8            # batch
    INPUT_SIZE = 32  # input_size == memory_size (hidden dim)
    OUTPUT_SIZE = 32
    T = 8            # sequence length for the fused-sequence demo
    ACTIVATION = "sig"

    key = jax.random.PRNGKey(0)
    k_params, k_x, k_h = jax.random.split(key, 3)

    params = init_params(k_params, INPUT_SIZE, OUTPUT_SIZE)
    # f32 MXU operands in the demo (strict parity); pass mxu_dtype=jnp.bfloat16
    # on v6e/v7x for the bf16-native MXU path.
    packed = pack_params(params, activation=ACTIVATION, mxu_dtype=jnp.float32)

    x_seq = jax.random.normal(k_x, (T, B, INPUT_SIZE), jnp.float32)
    h0 = jax.random.normal(k_h, (B, INPUT_SIZE), jnp.float32)

    # --- single step: matches the PyTorch module's forward(x, h_p) ---
    action, h = gru_forward(x_seq[0], h0, packed)
    jax.block_until_ready((action, h))
    action_ref, h_ref = gru_cell_reference(x_seq[0], h0, params, ACTIVATION)
    assert jnp.allclose(action, action_ref, atol=1e-4, rtol=1e-4)
    assert jnp.allclose(h, h_ref, atol=1e-4, rtol=1e-4)

    # --- whole sequence in ONE pallas_call (weights stay VMEM-resident) ---
    actions_seq, h_T = gru_sequence(x_seq, h0, packed, num_batch_chunks=1)
    jax.block_until_ready((actions_seq, h_T))
    actions_ref, h_T_ref = gru_sequence_reference(x_seq, h0, params, ACTIVATION)
    assert jnp.allclose(actions_seq, actions_ref, atol=1e-4, rtol=1e-4)
    assert jnp.allclose(h_T, h_T_ref, atol=1e-4, rtol=1e-4)

    print("KERNEL_OK")
</pallas_src>

<mosaic_0001>
module attributes {stable_mosaic.version = 11 : i64} {
  func.func @_gru_seq_kernel(%arg0: i32, %arg1: i32, %arg2: memref<1x8x32xf32, #tpu.memory_space<vmem>>, %arg3: memref<8x32xf32, #tpu.memory_space<vmem>>, %arg4: memref<32x32xf32, #tpu.memory_space<vmem>>, %arg5: memref<32x32xf32, #tpu.memory_space<vmem>>, %arg6: memref<32x32xf32, #tpu.memory_space<vmem>>, %arg7: memref<32x32xf32, #tpu.memory_space<vmem>>, %arg8: memref<32x32xf32, #tpu.memory_space<vmem>>, %arg9: memref<32x32xf32, #tpu.memory_space<vmem>>, %arg10: memref<1x32xf32, #tpu.memory_space<vmem>>, %arg11: memref<1x32xf32, #tpu.memory_space<vmem>>, %arg12: memref<1x32xf32, #tpu.memory_space<vmem>>, %arg13: memref<32x32xf32, #tpu.memory_space<vmem>>, %arg14: memref<1x32xf32, #tpu.memory_space<vmem>>, %arg15: memref<1x8x32xf32, #tpu.memory_space<vmem>>, %arg16: memref<8x32xf32, #tpu.memory_space<vmem>>, %arg17: memref<8x32xf32, #tpu.memory_space<vmem>>) attributes {dimension_semantics = [#tpu.dimension_semantics<parallel>, #tpu.dimension_semantics<arbitrary>], iteration_bounds = array<i64: 1, 1>, scalar_prefetch = 0 : i64, scratch_operands = 1 : i64, tpu.core_type = #tpu.core_type<tc>, window_params = [{transform_indices = @transform_0, window_bounds = array<i64: 1, 8, 32>}, {transform_indices = @transform_1, window_bounds = array<i64: 8, 32>}, {pipeline_mode = #tpu.pipeline_mode<synchronous>, transform_indices = @transform_2, window_bounds = array<i64: 32, 32>}, {pipeline_mode = #tpu.pipeline_mode<synchronous>, transform_indices = @transform_3, window_bounds = array<i64: 32, 32>}, {pipeline_mode = #tpu.pipeline_mode<synchronous>, transform_indices = @transform_4, window_bounds = array<i64: 32, 32>}, {pipeline_mode = #tpu.pipeline_mode<synchronous>, transform_indices = @transform_5, window_bounds = array<i64: 32, 32>}, {pipeline_mode = #tpu.pipeline_mode<synchronous>, transform_indices = @transform_6, window_bounds = array<i64: 32, 32>}, {pipeline_mode = #tpu.pipeline_mode<synchronous>, transform_indices = @transform_7, window_bounds = array<i64: 32, 32>}, {pipeline_mode = #tpu.pipeline_mode<synchronous>, transform_indices = @transform_8, window_bounds = array<i64: 1, 32>}, {pipeline_mode = #tpu.pipeline_mode<synchronous>, transform_indices = @transform_9, window_bounds = array<i64: 1, 32>}, {pipeline_mode = #tpu.pipeline_mode<synchronous>, transform_indices = @transform_10, window_bounds = array<i64: 1, 32>}, {pipeline_mode = #tpu.pipeline_mode<synchronous>, transform_indices = @transform_11, window_bounds = array<i64: 32, 32>}, {pipeline_mode = #tpu.pipeline_mode<synchronous>, transform_indices = @transform_12, window_bounds = array<i64: 1, 32>}, {transform_indices = @transform_13, window_bounds = array<i64: 1, 8, 32>}, {transform_indices = @transform_14, window_bounds = array<i64: 8, 32>}]} {
    %c0_i32 = arith.constant 0 : i32
    %0 = arith.cmpi eq, %arg1, %c0_i32 : i32
    %1 = arith.extui %0 : i1 to i32
    %c0_i32_0 = arith.constant 0 : i32
    %2 = arith.cmpi ne, %1, %c0_i32_0 : i32
    scf.if %2 {
      %c0_42 = arith.constant 0 : index
      %c0_43 = arith.constant 0 : index
      %56 = vector.load %arg3[%c0_42, %c0_43] : memref<8x32xf32, #tpu.memory_space<vmem>>, vector<8x32xf32>
      %c0_44 = arith.constant 0 : index
      %c0_45 = arith.constant 0 : index
      %57 = vector.load %arg17[%c0_44, %c0_45] : memref<8x32xf32, #tpu.memory_space<vmem>>, vector<8x32xf32>
      tpu.vector_store %arg17[%c0_44, %c0_45], %56 {strides = array<i32>} : memref<8x32xf32, #tpu.memory_space<vmem>>, vector<8x32xf32>,
    } else {
    }
    %c0 = arith.constant 0 : index
    %c0_1 = arith.constant 0 : index
    %3 = vector.load %arg17[%c0, %c0_1] : memref<8x32xf32, #tpu.memory_space<vmem>>, vector<8x32xf32>
    %c0_2 = arith.constant 0 : index
    %c0_3 = arith.constant 0 : index
    %c0_4 = arith.constant 0 : index
    %4 = vector.load %arg2[%c0_2, %c0_3, %c0_4] : memref<1x8x32xf32, #tpu.memory_space<vmem>>, vector<1x8x32xf32>
    %5 = vector.shape_cast %4 : vector<1x8x32xf32> to vector<8x32xf32>
    %c0_5 = arith.constant 0 : index
    %c0_6 = arith.constant 0 : index
    %6 = vector.load %arg4[%c0_5, %c0_6] : memref<32x32xf32, #tpu.memory_space<vmem>>, vector<32x32xf32>
    %cst = arith.constant dense<0.000000e+00> : vector<8x32xf32>
    %7 = tpu.matmul %5, %6, %cst {dimension_numbers = #tpu.dot_dimension_numbers<[1], [0], [0], [1], [0, 0, 1, 1], [], []>} : vector<8x32xf32>, vector<32x32xf32>, vector<8x32xf32> -> vector<8x32xf32>
    %c0_7 = arith.constant 0 : index
    %c0_8 = arith.constant 0 : index
    %8 = vector.load %arg5[%c0_7, %c0_8] : memref<32x32xf32, #tpu.memory_space<vmem>>, vector<32x32xf32>
    %cst_9 = arith.constant dense<0.000000e+00> : vector<8x32xf32>
    %9 = tpu.matmul %3, %8, %cst_9 {dimension_numbers = #tpu.dot_dimension_numbers<[1], [0], [0], [1], [0, 0, 1, 1], [], []>} : vector<8x32xf32>, vector<32x32xf32>, vector<8x32xf32> -> vector<8x32xf32>
    %10 = arith.addf %7, %9 : vector<8x32xf32>
    %c0_10 = arith.constant 0 : index
    %c0_11 = arith.constant 0 : index
    %11 = vector.load %arg10[%c0_10, %c0_11] : memref<1x32xf32, #tpu.memory_space<vmem>>, vector<1x32xf32>
    %12 = vector.broadcast %11 : vector<1x32xf32> to vector<8x32xf32>
    %13 = arith.addf %10, %12 : vector<8x32xf32>
    %14 = arith.negf %13 : vector<8x32xf32>
    %15 = math.exp %14 : vector<8x32xf32>
    %cst_12 = arith.constant 1.000000e+00 : f32
    %16 = vector.broadcast %cst_12 : f32 to vector<8x32xf32>
    %17 = arith.addf %16, %15 : vector<8x32xf32>
    %18 = arith.divf %16, %17 : vector<8x32xf32>
    %c0_13 = arith.constant 0 : index
    %c0_14 = arith.constant 0 : index
    %19 = vector.load %arg6[%c0_13, %c0_14] : memref<32x32xf32, #tpu.memory_space<vmem>>, vector<32x32xf32>
    %cst_15 = arith.constant dense<0.000000e+00> : vector<8x32xf32>
    %20 = tpu.matmul %5, %19, %cst_15 {dimension_numbers = #tpu.dot_dimension_numbers<[1], [0], [0], [1], [0, 0, 1, 1], [], []>} : vector<8x32xf32>, vector<32x32xf32>, vector<8x32xf32> -> vector<8x32xf32>
    %c0_16 = arith.constant 0 : index
    %c0_17 = arith.constant 0 : index
    %21 = vector.load %arg7[%c0_16, %c0_17] : memref<32x32xf32, #tpu.memory_space<vmem>>, vector<32x32xf32>
    %cst_18 = arith.constant dense<0.000000e+00> : vector<8x32xf32>
    %22 = tpu.matmul %3, %21, %cst_18 {dimension_numbers = #tpu.dot_dimension_numbers<[1], [0], [0], [1], [0, 0, 1, 1], [], []>} : vector<8x32xf32>, vector<32x32xf32>, vector<8x32xf32> -> vector<8x32xf32>
    %23 = arith.addf %20, %22 : vector<8x32xf32>
    %c0_19 = arith.constant 0 : index
    %c0_20 = arith.constant 0 : index
    %24 = vector.load %arg11[%c0_19, %c0_20] : memref<1x32xf32, #tpu.memory_space<vmem>>, vector<1x32xf32>
    %25 = vector.broadcast %24 : vector<1x32xf32> to vector<8x32xf32>
    %26 = arith.addf %23, %25 : vector<8x32xf32>
    %27 = arith.negf %26 : vector<8x32xf32>
    %28 = math.exp %27 : vector<8x32xf32>
    %cst_21 = arith.constant 1.000000e+00 : f32
    %29 = vector.broadcast %cst_21 : f32 to vector<8x32xf32>
    %30 = arith.addf %29, %28 : vector<8x32xf32>
    %31 = arith.divf %29, %30 : vector<8x32xf32>
    %c0_22 = arith.constant 0 : index
    %c0_23 = arith.constant 0 : index
    %32 = vector.load %arg8[%c0_22, %c0_23] : memref<32x32xf32, #tpu.memory_space<vmem>>, vector<32x32xf32>
    %cst_24 = arith.constant dense<0.000000e+00> : vector<8x32xf32>
    %33 = tpu.matmul %5, %32, %cst_24 {dimension_numbers = #tpu.dot_dimension_numbers<[1], [0], [0], [1], [0, 0, 1, 1], [], []>} : vector<8x32xf32>, vector<32x32xf32>, vector<8x32xf32> -> vector<8x32xf32>
    %34 = arith.mulf %3, %31 : vector<8x32xf32>
    %c0_25 = arith.constant 0 : index
    %c0_26 = arith.constant 0 : index
    %35 = vector.load %arg9[%c0_25, %c0_26] : memref<32x32xf32, #tpu.memory_space<vmem>>, vector<32x32xf32>
    %cst_27 = arith.constant dense<0.000000e+00> : vector<8x32xf32>
    %36 = tpu.matmul %34, %35, %cst_27 {dimension_numbers = #tpu.dot_dimension_numbers<[1], [0], [0], [1], [0, 0, 1, 1], [], []>} : vector<8x32xf32>, vector<32x32xf32>, vector<8x32xf32> -> vector<8x32xf32>
    %37 = arith.addf %33, %36 : vector<8x32xf32>
    %c0_28 = arith.constant 0 : index
    %c0_29 = arith.constant 0 : index
    %38 = vector.load %arg12[%c0_28, %c0_29] : memref<1x32xf32, #tpu.memory_space<vmem>>, vector<1x32xf32>
    %39 = vector.broadcast %38 : vector<1x32xf32> to vector<8x32xf32>
    %40 = arith.addf %37, %39 : vector<8x32xf32>
    %41 = math.tanh %40 : vector<8x32xf32>
    %42 = arith.subf %41, %3 : vector<8x32xf32>
    %43 = arith.mulf %18, %42 : vector<8x32xf32>
    %44 = arith.addf %3, %43 : vector<8x32xf32>
    %c0_30 = arith.constant 0 : index
    %c0_31 = arith.constant 0 : index
    %45 = vector.load %arg17[%c0_30, %c0_31] : memref<8x32xf32, #tpu.memory_space<vmem>>, vector<8x32xf32>
    tpu.vector_store %arg17[%c0_30, %c0_31], %44 {strides = array<i32>} : memref<8x32xf32, #tpu.memory_space<vmem>>, vector<8x32xf32>,
    %c0_32 = arith.constant 0 : index
    %c0_33 = arith.constant 0 : index
    %46 = vector.load %arg13[%c0_32, %c0_33] : memref<32x32xf32, #tpu.memory_space<vmem>>, vector<32x32xf32>
    %cst_34 = arith.constant dense<0.000000e+00> : vector<8x32xf32>
    %47 = tpu.matmul %44, %46, %cst_34 {dimension_numbers = #tpu.dot_dimension_numbers<[1], [0], [0], [1], [0, 0, 1, 1], [], []>} : vector<8x32xf32>, vector<32x32xf32>, vector<8x32xf32> -> vector<8x32xf32>
    %c0_35 = arith.constant 0 : index
    %c0_36 = arith.constant 0 : index
    %48 = vector.load %arg14[%c0_35, %c0_36] : memref<1x32xf32, #tpu.memory_space<vmem>>, vector<1x32xf32>
    %49 = vector.broadcast %48 : vector<1x32xf32> to vector<8x32xf32>
    %50 = arith.addf %47, %49 : vector<8x32xf32>
    %51 = math.tanh %50 : vector<8x32xf32>
    %c0_37 = arith.constant 0 : index
    %c0_38 = arith.constant 0 : index
    %c0_39 = arith.constant 0 : index
    %52 = vector.load %arg15[%c0_37, %c0_38, %c0_39] : memref<1x8x32xf32, #tpu.memory_space<vmem>>, vector<1x8x32xf32>
    %53 = vector.shape_cast %52 : vector<1x8x32xf32> to vector<8x32xf32>
    %54 = vector.shape_cast %51 : vector<8x32xf32> to vector<1x8x32xf32>
    tpu.vector_store %arg15[%c0_37, %c0_38, %c0_39], %54 {strides = array<i32>} : memref<1x8x32xf32, #tpu.memory_space<vmem>>, vector<1x8x32xf32>,
    %c0_40 = arith.constant 0 : index
    %c0_41 = arith.constant 0 : index
    %55 = vector.load %arg16[%c0_40, %c0_41] : memref<8x32xf32, #tpu.memory_space<vmem>>, vector<8x32xf32>
    tpu.vector_store %arg16[%c0_40, %c0_41], %44 {strides = array<i32>} : memref<8x32xf32, #tpu.memory_space<vmem>>, vector<8x32xf32>,
    return
  }
  func.func @transform_0(%arg0: i32, %arg1: i32) -> (i32, i32, i32) {
    %c0_i32 = arith.constant 0 : i32
    %c0_i32_0 = arith.constant 0 : i32
    return %arg1, %arg0, %c0_i32 : i32, i32, i32
  }
  func.func @transform_1(%arg0: i32, %arg1: i32) -> (i32, i32) {
    %c0_i32 = arith.constant 0 : i32
    %c0_i32_0 = arith.constant 0 : i32
    return %arg0, %c0_i32 : i32, i32
  }
  func.func @transform_2(%arg0: i32, %arg1: i32) -> (i32, i32) {
    %c0_i32 = arith.constant 0 : i32
    %c0_i32_0 = arith.constant 0 : i32
    %c0_i32_1 = arith.constant 0 : i32
    return %c0_i32, %c0_i32_0 : i32, i32
  }
  func.func @transform_3(%arg0: i32, %arg1: i32) -> (i32, i32) {
    %c0_i32 = arith.constant 0 : i32
    %c0_i32_0 = arith.constant 0 : i32
    %c0_i32_1 = arith.constant 0 : i32
    return %c0_i32, %c0_i32_0 : i32, i32
  }
  func.func @transform_4(%arg0: i32, %arg1: i32) -> (i32, i32) {
    %c0_i32 = arith.constant 0 : i32
    %c0_i32_0 = arith.constant 0 : i32
    %c0_i32_1 = arith.constant 0 : i32
    return %c0_i32, %c0_i32_0 : i32, i32
  }
  func.func @transform_5(%arg0: i32, %arg1: i32) -> (i32, i32) {
    %c0_i32 = arith.constant 0 : i32
    %c0_i32_0 = arith.constant 0 : i32
    %c0_i32_1 = arith.constant 0 : i32
    return %c0_i32, %c0_i32_0 : i32, i32
  }
  func.func @transform_6(%arg0: i32, %arg1: i32) -> (i32, i32) {
    %c0_i32 = arith.constant 0 : i32
    %c0_i32_0 = arith.constant 0 : i32
    %c0_i32_1 = arith.constant 0 : i32
    return %c0_i32, %c0_i32_0 : i32, i32
  }
  func.func @transform_7(%arg0: i32, %arg1: i32) -> (i32, i32) {
    %c0_i32 = arith.constant 0 : i32
    %c0_i32_0 = arith.constant 0 : i32
    %c0_i32_1 = arith.constant 0 : i32
    return %c0_i32, %c0_i32_0 : i32, i32
  }
  func.func @transform_8(%arg0: i32, %arg1: i32) -> (i32, i32) {
    %c0_i32 = arith.constant 0 : i32
    %c0_i32_0 = arith.constant 0 : i32
    %c0_i32_1 = arith.constant 0 : i32
    return %c0_i32, %c0_i32_0 : i32, i32
  }
  func.func @transform_9(%arg0: i32, %arg1: i32) -> (i32, i32) {
    %c0_i32 = arith.constant 0 : i32
    %c0_i32_0 = arith.constant 0 : i32
    %c0_i32_1 = arith.constant 0 : i32
    return %c0_i32, %c0_i32_0 : i32, i32
  }
  func.func @transform_10(%arg0: i32, %arg1: i32) -> (i32, i32) {
    %c0_i32 = arith.constant 0 : i32
    %c0_i32_0 = arith.constant 0 : i32
    %c0_i32_1 = arith.constant 0 : i32
    return %c0_i32, %c0_i32_0 : i32, i32
  }
  func.func @transform_11(%arg0: i32, %arg1: i32) -> (i32, i32) {
    %c0_i32 = arith.constant 0 : i32
    %c0_i32_0 = arith.constant 0 : i32
    %c0_i32_1 = arith.constant 0 : i32
    return %c0_i32, %c0_i32_0 : i32, i32
  }
  func.func @transform_12(%arg0: i32, %arg1: i32) -> (i32, i32) {
    %c0_i32 = arith.constant 0 : i32
    %c0_i32_0 = arith.constant 0 : i32
    %c0_i32_1 = arith.constant 0 : i32
    return %c0_i32, %c0_i32_0 : i32, i32
  }
  func.func @transform_13(%arg0: i32, %arg1: i32) -> (i32, i32, i32) {
    %c0_i32 = arith.constant 0 : i32
    %c0_i32_0 = arith.constant 0 : i32
    return %arg1, %arg0, %c0_i32 : i32, i32, i32
  }
  func.func @transform_14(%arg0: i32, %arg1: i32) -> (i32, i32) {
    %c0_i32 = arith.constant 0 : i32
    %c0_i32_0 = arith.constant 0 : i32
    return %arg0, %c0_i32 : i32, i32
  }
}

</mosaic_0001>

<llo_original>
// kernel: tpu_custom_call.1
$region0: #{tpu_custom_call.1}
  #allocation0 [shape = 'u32[]', space=smem, size = 0x4, offset = 0x4, fixed_abs, tag = 'smem constant byte address 0x4 - core index']
  #allocation1 [shape = 'u32[144,128]{1,0:T(1,128)}', space=vmem, size = 0x12000, scoped, tag = 'internal scratch']
  #allocation2 [shape = 'f32[8,32]{1,0:T(8,128)}', space=vmem, size = 0x1000, scoped, tag = 'scratch operand']
  %s0 = inlined_call_operand.hbm [shape: f32[1,8,32], index: 0, kind: input, shape index: {}]
  %s1 = inlined_call_operand.hbm [shape: f32[8,32], index: 1, kind: input, shape index: {}]
  %s2 = inlined_call_operand.hbm [shape: f32[32,32], index: 2, kind: input, shape index: {}]
  %s3 = inlined_call_operand.hbm [shape: f32[32,32], index: 3, kind: input, shape index: {}]
  %s4 = inlined_call_operand.hbm [shape: f32[32,32], index: 4, kind: input, shape index: {}]
  %s5 = inlined_call_operand.hbm [shape: f32[32,32], index: 5, kind: input, shape index: {}]
  %s6 = inlined_call_operand.hbm [shape: f32[32,32], index: 6, kind: input, shape index: {}]
  %s7 = inlined_call_operand.hbm [shape: f32[32,32], index: 7, kind: input, shape index: {}]
  %s8 = inlined_call_operand.vmem [shape: f32[1,32], index: 8, kind: input, shape index: {}]
  %s9 = inlined_call_operand.vmem [shape: f32[1,32], index: 9, kind: input, shape index: {}]
  %s10 = inlined_call_operand.vmem [shape: f32[1,32], index: 10, kind: input, shape index: {}]
  %s11 = inlined_call_operand.vmem [shape: f32[32,32], index: 11, kind: input, shape index: {}]
  %s12 = inlined_call_operand.vmem [shape: f32[1,32], index: 12, kind: input, shape index: {}]
  %s13 = inlined_call_operand.hbm [shape: f32[1,8,32], index: 13, kind: output, shape index: {0}]
  %s14 = inlined_call_operand.hbm [shape: f32[8,32], index: 14, kind: output, shape index: {1}]
  %15 = xla_tuple %s13, %s14
  %s16 = sld [smem:[#allocation0]]
  $region106: #{tpu_custom_call.1} parent=0
    _
  %s18 = ssub.s32 1, %s16
  %s19 = scalar_select 0, %s18, %s16
  $region1: #{tpu_custom_call.1} parent=0
    #allocation3 [shape = 'u8[4096]{0}', space=vmem, size = 0x1000, scoped, tag = 'input window, operand 0, single buffered']
    #allocation4 [shape = 's32[1]{0}', space=sflag, size = 0x4, scoped, tag = 'scoped memory for tpu_custom_call.1']
    #allocation5 [shape = 's32[1]{0}', space=sflag, size = 0x4, scoped, tag = 'scoped memory for tpu_custom_call.1']
    #allocation6 [shape = 'u8[4096]{0}', space=vmem, size = 0x1000, scoped, tag = 'input window, operand 1, single buffered']
    #allocation7 [shape = 's32[1]{0}', space=sflag, size = 0x4, scoped, tag = 'scoped memory for tpu_custom_call.1']
    #allocation8 [shape = 'u8[16384]{0}', space=vmem, size = 0x4000, scoped, tag = 'input window, operand 2, single buffered']
    #allocation9 [shape = 'u8[16384]{0}', space=vmem, size = 0x4000, scoped, tag = 'input window, operand 3, single buffered']
    #allocation10 [shape = 's32[1]{0}', space=sflag, size = 0x4, scoped, tag = 'scoped memory for tpu_custom_call.1']
    #allocation11 [shape = 'u8[16384]{0}', space=vmem, size = 0x4000, scoped, tag = 'input window, operand 4, single buffered']
    #allocation12 [shape = 'u8[16384]{0}', space=vmem, size = 0x4000, scoped, tag = 'input window, operand 5, single buffered']
    #allocation13 [shape = 's32[1]{0}', space=sflag, size = 0x4, scoped, tag = 'scoped memory for tpu_custom_call.1']
    #allocation14 [shape = 'u8[16384]{0}', space=vmem, size = 0x4000, scoped, tag = 'input window, operand 6, single buffered']
    #allocation15 [shape = 'u8[16384]{0}', space=vmem, size = 0x4000, scoped, tag = 'input window, operand 7, single buffered']
    #allocation16 [shape = 's32[1]{0}', space=sflag, size = 0x4, scoped, tag = 'scoped memory for tpu_custom_call.1']
    #allocation17 [shape = 'u8[4096]{0}', space=vmem, size = 0x1000, scoped, tag = 'output window, operand 0, single buffered']
    #allocation18 [shape = 'u8[4096]{0}', space=vmem, size = 0x1000, scoped, tag = 'output window, operand 1, single buffered']
    #allocation19 [shape = 's32[1]{0}', space=sflag, size = 0x4, scoped, tag = 'scoped memory for tpu_custom_call.1']
    %20 = vsyncpa [#allocation4], 0
    %21 = vsyncpa [#allocation7], 0
    %22 = vsyncpa [#allocation10], 0
    %23 = vsyncpa [#allocation13], 0
    %24 = vsyncpa [#allocation16], 0
    %25 = vsyncpa [#allocation5], 0
    %26 = vsyncpa [#allocation19], 0
    // Predicated region
    $region2: #{tpu_custom_call.1} parent=1 // pred_check
      _
    $region3: #{tpu_custom_call.1} parent=1 // pred_check_branch
      %28 = sbr.rel (0) target = $region5
    $region4: #{tpu_custom_call.1} parent=1 // pred_region
      %s30 = ssub.s32 128, 128
      %31 = vsyncadd [#allocation4], %s30
      %s33 = sshll.u32 [#allocation3], 4
      %s34 = int_to_ptr.vmem [resolvable:$true] %s33
      %36 = dma.hbm_to_vmem [thread:$0]  %s0, 128, %s34, [#allocation4]
    $region5: #{tpu_custom_call.1} parent=1 // pred_fallthru
      _
    // Predicated region
    $region6: #{tpu_custom_call.1} parent=1 // pred_check
      _
    $region7: #{tpu_custom_call.1} parent=1 // pred_check_branch
      %38 = sbr.rel (0) target = $region9
    $region8: #{tpu_custom_call.1} parent=1 // pred_region
      %s40 = ssub.s32 128, 128
      %41 = vsyncadd [#allocation7], %s40
      %s43 = sshll.u32 [#allocation6], 4
      %s44 = int_to_ptr.vmem [resolvable:$true] %s43
      %46 = dma.hbm_to_vmem [thread:$0]  %s1, 128, %s44, [#allocation7]
    $region9: #{tpu_custom_call.1} parent=1 // pred_fallthru
      _
    // Predicated region
    $region10: #{tpu_custom_call.1} parent=1 // pred_check
      _
    $region11: #{tpu_custom_call.1} parent=1 // pred_check_branch
      %48 = sbr.rel (0) target = $region13
    $region12: #{tpu_custom_call.1} parent=1 // pred_region
      %s50 = ssub.s32 512, 512
      %51 = vsyncadd [#allocation7], %s50
      %s52 = sshll.u32 [#allocation8], 4
      %s53 = int_to_ptr.vmem [resolvable:$true] %s52
      %58 = dma.hbm_to_vmem [thread:$0]  %s2, 512, %s53, [#allocation7], 128, 128, 8
    $region13: #{tpu_custom_call.1} parent=1 // pred_fallthru
      _
    // Predicated region
    $region14: #{tpu_custom_call.1} parent=1 // pred_check
      _
    $region15: #{tpu_custom_call.1} parent=1 // pred_check_branch
      %60 = sbr.rel (0) target = $region17
    $region16: #{tpu_custom_call.1} parent=1 // pred_region
      %s62 = ssub.s32 512, 512
      %63 = vsyncadd [#allocation10], %s62
      %s64 = sshll.u32 [#allocation9], 4
      %s65 = int_to_ptr.vmem [resolvable:$true] %s64
      %70 = dma.hbm_to_vmem [thread:$0]  %s3, 512, %s65, [#allocation10], 128, 128, 8
    $region17: #{tpu_custom_call.1} parent=1 // pred_fallthru
      _
    // Predicated region
    $region18: #{tpu_custom_call.1} parent=1 // pred_check
      _
    $region19: #{tpu_custom_call.1} parent=1 // pred_check_branch
      %72 = sbr.rel (0) target = $region21
    $region20: #{tpu_custom_call.1} parent=1 // pred_region
      %s74 = ssub.s32 512, 512
      %75 = vsyncadd [#allocation10], %s74
      %s76 = sshll.u32 [#allocation11], 4
      %s77 = int_to_ptr.vmem [resolvable:$true] %s76
      %82 = dma.hbm_to_vmem [thread:$0]  %s4, 512, %s77, [#allocation10], 128, 128, 8
    $region21: #{tpu_custom_call.1} parent=1 // pred_fallthru
      _
    // Predicated region
    $region22: #{tpu_custom_call.1} parent=1 // pred_check
      _
    $region23: #{tpu_custom_call.1} parent=1 // pred_check_branch
      %84 = sbr.rel (0) target = $region25
    $region24: #{tpu_custom_call.1} parent=1 // pred_region
      %s86 = ssub.s32 512, 512
      %87 = vsyncadd [#allocation13], %s86
      %s88 = sshll.u32 [#allocation12], 4
      %s89 = int_to_ptr.vmem [resolvable:$true] %s88
      %94 = dma.hbm_to_vmem [thread:$0]  %s5, 512, %s89, [#allocation13], 128, 128, 8
    $region25: #{tpu_custom_call.1} parent=1 // pred_fallthru
      _
    // Predicated region
    $region26: #{tpu_custom_call.1} parent=1 // pred_check
      _
    $region27: #{tpu_custom_call.1} parent=1 // pred_check_branch
      %96 = sbr.rel (0) target = $region29
    $region28: #{tpu_custom_call.1} parent=1 // pred_region
      %s98 = ssub.s32 512, 512
      %99 = vsyncadd [#allocation13], %s98
      %s100 = sshll.u32 [#allocation14], 4
      %s101 = int_to_ptr.vmem [resolvable:$true] %s100
      %106 = dma.hbm_to_vmem [thread:$0]  %s6, 512, %s101, [#allocation13], 128, 128, 8
    $region29: #{tpu_custom_call.1} parent=1 // pred_fallthru
      _
    // Predicated region
    $region30: #{tpu_custom_call.1} parent=1 // pred_check
      _
    $region31: #{tpu_custom_call.1} parent=1 // pred_check_branch
      %108 = sbr.rel (0) target = $region33
    $region32: #{tpu_custom_call.1} parent=1 // pred_region
      %s110 = ssub.s32 512, 512
      %111 = vsyncadd [#allocation16], %s110
      %s112 = sshll.u32 [#allocation15], 4
      %s113 = int_to_ptr.vmem [resolvable:$true] %s112
      %118 = dma.hbm_to_vmem [thread:$0]  %s7, 512, %s113, [#allocation16], 128, 128, 8
    $region33: #{tpu_custom_call.1} parent=1 // pred_fallthru
      _
    // Predicated region
    $region34: #{tpu_custom_call.1} parent=1 // pred_check
      _
    $region35: #{tpu_custom_call.1} parent=1 // pred_check_branch
      %120 = sbr.rel (0) target = $region37
    $region36: #{tpu_custom_call.1} parent=1 // pred_region
      _
    $region37: #{tpu_custom_call.1} parent=1 // pred_fallthru
      _
    // Predicated region
    $region38: #{tpu_custom_call.1} parent=1 // pred_check
      _
    $region39: #{tpu_custom_call.1} parent=1 // pred_check_branch
      %122 = sbr.rel (0) target = $region41
    $region40: #{tpu_custom_call.1} parent=1 // pred_region
      _
    $region41: #{tpu_custom_call.1} parent=1 // pred_fallthru
      _
    // Predicated region
    $region42: #{tpu_custom_call.1} parent=1 // pred_check
      _
    $region43: #{tpu_custom_call.1} parent=1 // pred_check_branch
      %124 = sbr.rel (0) target = $region45
    $region44: #{tpu_custom_call.1} parent=1 // pred_region
      _
    $region45: #{tpu_custom_call.1} parent=1 // pred_fallthru
      _
    // Predicated region
    $region46: #{tpu_custom_call.1} parent=1 // pred_check
      _
    $region47: #{tpu_custom_call.1} parent=1 // pred_check_branch
      %126 = sbr.rel (0) target = $region49
    $region48: #{tpu_custom_call.1} parent=1 // pred_region
      _
    $region49: #{tpu_custom_call.1} parent=1 // pred_fallthru
      _
    // Predicated region
    $region50: #{tpu_custom_call.1} parent=1 // pred_check
      _
    $region51: #{tpu_custom_call.1} parent=1 // pred_check_branch
      %128 = sbr.rel (0) target = $region53
    $region52: #{tpu_custom_call.1} parent=1 // pred_region
      _
    $region53: #{tpu_custom_call.1} parent=1 // pred_fallthru
      _
    // Predicated region
    $region54: #{tpu_custom_call.1} parent=1 // pred_check
      _
    $region55: #{tpu_custom_call.1} parent=1 // pred_check_branch
      %130 = sbr.rel (0) target = $region57
    $region56: #{tpu_custom_call.1} parent=1 // pred_region
      %131 = dma.done [#allocation4], 128
    $region57: #{tpu_custom_call.1} parent=1 // pred_fallthru
      _
    // Predicated region
    $region58: #{tpu_custom_call.1} parent=1 // pred_check
      _
    $region59: #{tpu_custom_call.1} parent=1 // pred_check_branch
      %133 = sbr.rel (0) target = $region61
    $region60: #{tpu_custom_call.1} parent=1 // pred_region
      %134 = dma.done [#allocation7], 128
    $region61: #{tpu_custom_call.1} parent=1 // pred_fallthru
      _
    // Predicated region
    $region62: #{tpu_custom_call.1} parent=1 // pred_check
      _
    $region63: #{tpu_custom_call.1} parent=1 // pred_check_branch
      %136 = sbr.rel (0) target = $region65
    $region64: #{tpu_custom_call.1} parent=1 // pred_region
      %137 = dma.done [#allocation7], 512
    $region65: #{tpu_custom_call.1} parent=1 // pred_fallthru
      _
    // Predicated region
    $region66: #{tpu_custom_call.1} parent=1 // pred_check
      _
    $region67: #{tpu_custom_call.1} parent=1 // pred_check_branch
      %139 = sbr.rel (0) target = $region69
    $region68: #{tpu_custom_call.1} parent=1 // pred_region
      %140 = dma.done [#allocation10], 512
    $region69: #{tpu_custom_call.1} parent=1 // pred_fallthru
      _
    // Predicated region
    $region70: #{tpu_custom_call.1} parent=1 // pred_check
      _
    $region71: #{tpu_custom_call.1} parent=1 // pred_check_branch
      %142 = sbr.rel (0) target = $region73
    $region72: #{tpu_custom_call.1} parent=1 // pred_region
      %143 = dma.done [#allocation10], 512
    $region73: #{tpu_custom_call.1} parent=1 // pred_fallthru
      _
    // Predicated region
    $region74: #{tpu_custom_call.1} parent=1 // pred_check
      _
    $region75: #{tpu_custom_call.1} parent=1 // pred_check_branch
      %145 = sbr.rel (0) target = $region77
    $region76: #{tpu_custom_call.1} parent=1 // pred_region
      %146 = dma.done [#allocation13], 512
    $region77: #{tpu_custom_call.1} parent=1 // pred_fallthru
      _
    // Predicated region
    $region78: #{tpu_custom_call.1} parent=1 // pred_check
      _
    $region79: #{tpu_custom_call.1} parent=1 // pred_check_branch
      %148 = sbr.rel (0) target = $region81
    $region80: #{tpu_custom_call.1} parent=1 // pred_region
      %149 = dma.done [#allocation13], 512
    $region81: #{tpu_custom_call.1} parent=1 // pred_fallthru
      _
    // Predicated region
    $region82: #{tpu_custom_call.1} parent=1 // pred_check
      _
    $region83: #{tpu_custom_call.1} parent=1 // pred_check_branch
      %151 = sbr.rel (0) target = $region85
    $region84: #{tpu_custom_call.1} parent=1 // pred_region
      %152 = dma.done [#allocation16], 512
    $region85: #{tpu_custom_call.1} parent=1 // pred_fallthru
      _
    %p153 = scmp.eq.s32.totalorder 0, 0
    // Predicated region
    $region86: #{tpu_custom_call.1} parent=1 // pred_check
      %p154 = pneg %p153
    $region87: #{tpu_custom_call.1} parent=1 // pred_check_branch
      %156 = sbr.rel (%p154) target = $region89
    $region88: #{tpu_custom_call.1} parent=1 // pred_region
      %v157 = vld [vmem:[#allocation6] sm:$0xff]
      %vm158 = vcmask 261120
      %159 = vst.msk [vmem:[#allocation2] sm:$0xff] %vm158, %v157
    $region89: #{tpu_custom_call.1} parent=1 // pred_fallthru
      _
    %v160 = vld [vmem:[#allocation2] sm:$0xff]
    %v161 = vld [vmem:[#allocation3] sm:$0xff]
    %v162 = vld [vmem:[#allocation8] sm:$0xff]
    %v163 = vld [vmem:[#allocation8 + $0x8] sm:$0xff]
    %v164 = vld [vmem:[#allocation8 + $0x10] sm:$0xff]
    %v165 = vld [vmem:[#allocation8 + $0x18] sm:$0xff]
    %v166 = vld [vmem:[#allocation9] sm:$0xff]
    %v167 = vld [vmem:[#allocation9 + $0x8] sm:$0xff]
    %v168 = vld [vmem:[#allocation9 + $0x10] sm:$0xff]
    %v169 = vld [vmem:[#allocation9 + $0x18] sm:$0xff]
    %vm170 = vcmask 261120
    %v172 = vsel %vm170, %v160, 0
    %174 = vmatprep.subr.mxu0 0.0
    %175 = vmatpush1.msra.mxu0 %v166
    %176 = vmatprep.subr.mxu0 0.0
    %177 = vmatpush1.msra.mxu0 %v167
    %178 = vmatprep.subr.mxu0 0.0
    %179 = vmatpush1.msra.mxu0 %v168
    %180 = vmatprep.subr.mxu0 0.0
    %181 = vmatpush1.msra.mxu0 %v169
    %182 = vmatprep.subr.mxu0 0.0
    %183 = vmatpush1.msra.mxu0 0.0
    %184 = vmatprep.subr.mxu0 0.0
    %185 = vmatpush1.msra.mxu0 0.0
    %186 = vmatprep.subr.mxu0 0.0
    %187 = vmatpush1.msra.mxu0 0.0
    %188 = vmatprep.subr.mxu0 0.0
    %189 = vmatpush1.msra.mxu0 0.0
    %190 = vmatprep.subr.mxu0 0.0
    %191 = vmatpush1.msra.mxu0 0.0
    %192 = vmatprep.subr.mxu0 0.0
    %193 = vmatpush1.msra.mxu0 0.0
    %194 = vmatprep.subr.mxu0 0.0
    %195 = vmatpush1.msra.mxu0 0.0
    %196 = vmatprep.subr.mxu0 0.0
    %197 = vmatpush1.msra.mxu0 0.0
    %198 = vmatprep.subr.mxu0 0.0
    %199 = vmatpush1.msra.mxu0 0.0
    %200 = vmatprep.subr.mxu0 0.0
    %201 = vmatpush1.msra.mxu0 0.0
    %202 = vmatprep.subr.mxu0 0.0
    %203 = vmatpush1.msra.mxu0 0.0
    %204 = vmatprep.subr.mxu0 0.0
    %205 = vmatpush1.msra.mxu0 0.0
    %206 = vmatprep.subr.mxu0 0.0
    %207 = vmatpush1.msra.mxu0 0.0
    %208 = vmatprep.subr.mxu0 0.0
    %209 = vmatpush1.msra.mxu0 0.0
    %210 = vmatprep.subr.mxu0 0.0
    %211 = vmatpush1.msra.mxu0 0.0
    %212 = vmatprep.subr.mxu0 0.0
    %213 = vmatpush1.msra.mxu0 0.0
    %214 = vmatprep.subr.mxu0 0.0
    %215 = vmatpush1.msra.mxu0 0.0
    %216 = vmatprep.subr.mxu0 0.0
    %217 = vmatpush1.msra.mxu0 0.0
    %218 = vmatprep.subr.mxu0 0.0
    %219 = vmatpush1.msra.mxu0 0.0
    %220 = vmatprep.subr.mxu0 0.0
    %221 = vmatpush1.msra.mxu0 0.0
    %222 = vmatprep.subr.mxu0 0.0
    %223 = vmatpush1.msra.mxu0 0.0
    %224 = vmatprep.subr.mxu0 0.0
    %225 = vmatpush1.msra.mxu0 0.0
    %226 = vmatprep.subr.mxu0 0.0
    %227 = vmatpush1.msra.mxu0 0.0
    %228 = vmatprep.subr.mxu0 0.0
    %229 = vmatpush1.msra.mxu0 0.0
    %230 = vmatprep.subr.mxu0 0.0
    %231 = vmatpush1.msra.mxu0 0.0
    %232 = vmatprep.subr.mxu0 0.0
    %233 = vmatpush1.msra.mxu0 0.0
    %234 = vmatprep.subr.mxu0 0.0
    %235 = vmatpush1.msra.mxu0 0.0
    %236 = vmatprep.subr.mxu0 0.0
    %237 = vmatpush1.msra.mxu0 0.0
    %238 = vmatprep.mubr.f32.mxu0 0.0
    %239 = vmatmul.mubr.f32.gmra.mrb[0].mxu0 %v172
    %v240 = vpop.f32.mrb[0].mxu0
    %v241 = vadd.f32 0.0, %v240
    %v242 = vpop.f32.mrb[0].mxu0
    %243 = vdwg.mxu0
    %v245 = vsel %vm170, %v161, 0
    %247 = vmatprep.subr.mxu0 0.0
    %248 = vmatpush1.msra.mxu0 %v162
    %249 = vmatprep.subr.mxu0 0.0
    %250 = vmatpush1.msra.mxu0 %v163
    %251 = vmatprep.subr.mxu0 0.0
    %252 = vmatpush1.msra.mxu0 %v164
    %253 = vmatprep.subr.mxu0 0.0
    %254 = vmatpush1.msra.mxu0 %v165
    %255 = vmatprep.subr.mxu0 0.0
    %256 = vmatpush1.msra.mxu0 0.0
    %257 = vmatprep.subr.mxu0 0.0
    %258 = vmatpush1.msra.mxu0 0.0
    %259 = vmatprep.subr.mxu0 0.0
    %260 = vmatpush1.msra.mxu0 0.0
    %261 = vmatprep.subr.mxu0 0.0
    %262 = vmatpush1.msra.mxu0 0.0
    %263 = vmatprep.subr.mxu0 0.0
    %264 = vmatpush1.msra.mxu0 0.0
    %265 = vmatprep.subr.mxu0 0.0
    %266 = vmatpush1.msra.mxu0 0.0
    %267 = vmatprep.subr.mxu0 0.0
    %268 = vmatpush1.msra.mxu0 0.0
    %269 = vmatprep.subr.mxu0 0.0
    %270 = vmatpush1.msra.mxu0 0.0
    %271 = vmatprep.subr.mxu0 0.0
    %272 = vmatpush1.msra.mxu0 0.0
    %273 = vmatprep.subr.mxu0 0.0
    %274 = vmatpush1.msra.mxu0 0.0
    %275 = vmatprep.subr.mxu0 0.0
    %276 = vmatpush1.msra.mxu0 0.0
    %277 = vmatprep.subr.mxu0 0.0
    %278 = vmatpush1.msra.mxu0 0.0
    %279 = vmatprep.subr.mxu0 0.0
    %280 = vmatpush1.msra.mxu0 0.0
    %281 = vmatprep.subr.mxu0 0.0
    %282 = vmatpush1.msra.mxu0 0.0
    %283 = vmatprep.subr.mxu0 0.0
    %284 = vmatpush1.msra.mxu0 0.0
    %285 = vmatprep.subr.mxu0 0.0
    %286 = vmatpush1.msra.mxu0 0.0
    %287 = vmatprep.subr.mxu0 0.0
    %288 = vmatpush1.msra.mxu0 0.0
    %289 = vmatprep.subr.mxu0 0.0
    %290 = vmatpush1.msra.mxu0 0.0
    %291 = vmatprep.subr.mxu0 0.0
    %292 = vmatpush1.msra.mxu0 0.0
    %293 = vmatprep.subr.mxu0 0.0
    %294 = vmatpush1.msra.mxu0 0.0
    %295 = vmatprep.subr.mxu0 0.0
    %296 = vmatpush1.msra.mxu0 0.0
    %297 = vmatprep.subr.mxu0 0.0
    %298 = vmatpush1.msra.mxu0 0.0
    %299 = vmatprep.subr.mxu0 0.0
    %300 = vmatpush1.msra.mxu0 0.0
    %301 = vmatprep.subr.mxu0 0.0
    %302 = vmatpush1.msra.mxu0 0.0
    %303 = vmatprep.subr.mxu0 0.0
    %304 = vmatpush1.msra.mxu0 0.0
    %305 = vmatprep.subr.mxu0 0.0
    %306 = vmatpush1.msra.mxu0 0.0
    %307 = vmatprep.subr.mxu0 0.0
    %308 = vmatpush1.msra.mxu0 0.0
    %309 = vmatprep.subr.mxu0 0.0
    %310 = vmatpush1.msra.mxu0 0.0
    %311 = vmatprep.mubr.f32.mxu0 0.0
    %312 = vmatmul.mubr.f32.gmra.mrb[0].mxu0 %v245
    %v313 = vpop.f32.mrb[0].mxu0
    %v314 = vadd.f32 %v241, %v313
    %v315 = vpop.f32.mrb[0].mxu0
    %316 = vdwg.mxu0
    %v317 = vld [vmem:[%s8] sm:$0x1]
    %v319 = vlaneseq
    %v320 = vshrl.u32 %v319, 7
    %v321 = vsub.s32 0, %v320
    %v322 = vrot.slane %v317, %v321
    %v324 = vadd.f32 %v314, %v322
    %v325 = vxor.u32 %v324, 2147483648
    %v326 = vmul.f32 %v325, 1.442695
    %v327 = vpow.pop %v326
    %v328 = vadd.f32 %v327, 1.0
    %v329 = vrcp.pop %v328
    %v330 = vmul.f32 1.0, %v329
    %v331 = vld [vmem:[#allocation11] sm:$0xff]
    %v332 = vld [vmem:[#allocation11 + $0x8] sm:$0xff]
    %v333 = vld [vmem:[#allocation11 + $0x10] sm:$0xff]
    %v334 = vld [vmem:[#allocation11 + $0x18] sm:$0xff]
    %v335 = vld [vmem:[#allocation12] sm:$0xff]
    %v336 = vld [vmem:[#allocation12 + $0x8] sm:$0xff]
    %v337 = vld [vmem:[#allocation12 + $0x10] sm:$0xff]
    %v338 = vld [vmem:[#allocation12 + $0x18] sm:$0xff]
    %339 = vmatprep.subr.mxu0 0.0
    %340 = vmatpush1.msra.mxu0 %v335
    %341 = vmatprep.subr.mxu0 0.0
    %342 = vmatpush1.msra.mxu0 %v336
    %343 = vmatprep.subr.mxu0 0.0
    %344 = vmatpush1.msra.mxu0 %v337
    %345 = vmatprep.subr.mxu0 0.0
    %346 = vmatpush1.msra.mxu0 %v338
    %347 = vmatprep.subr.mxu0 0.0
    %348 = vmatpush1.msra.mxu0 0.0
    %349 = vmatprep.subr.mxu0 0.0
    %350 = vmatpush1.msra.mxu0 0.0
    %351 = vmatprep.subr.mxu0 0.0
    %352 = vmatpush1.msra.mxu0 0.0
    %353 = vmatprep.subr.mxu0 0.0
    %354 = vmatpush1.msra.mxu0 0.0
    %355 = vmatprep.subr.mxu0 0.0
    %356 = vmatpush1.msra.mxu0 0.0
    %357 = vmatprep.subr.mxu0 0.0
    %358 = vmatpush1.msra.mxu0 0.0
    %359 = vmatprep.subr.mxu0 0.0
    %360 = vmatpush1.msra.mxu0 0.0
    %361 = vmatprep.subr.mxu0 0.0
    %362 = vmatpush1.msra.mxu0 0.0
    %363 = vmatprep.subr.mxu0 0.0
    %364 = vmatpush1.msra.mxu0 0.0
    %365 = vmatprep.subr.mxu0 0.0
    %366 = vmatpush1.msra.mxu0 0.0
    %367 = vmatprep.subr.mxu0 0.0
    %368 = vmatpush1.msra.mxu0 0.0
    %369 = vmatprep.subr.mxu0 0.0
    %370 = vmatpush1.msra.mxu0 0.0
    %371 = vmatprep.subr.mxu0 0.0
    %372 = vmatpush1.msra.mxu0 0.0
    %373 = vmatprep.subr.mxu0 0.0
    %374 = vmatpush1.msra.mxu0 0.0
    %375 = vmatprep.subr.mxu0 0.0
    %376 = vmatpush1.msra.mxu0 0.0
    %377 = vmatprep.subr.mxu0 0.0
    %378 = vmatpush1.msra.mxu0 0.0
    %379 = vmatprep.subr.mxu0 0.0
    %380 = vmatpush1.msra.mxu0 0.0
    %381 = vmatprep.subr.mxu0 0.0
    %382 = vmatpush1.msra.mxu0 0.0
    %383 = vmatprep.subr.mxu0 0.0
    %384 = vmatpush1.msra.mxu0 0.0
    %385 = vmatprep.subr.mxu0 0.0
    %386 = vmatpush1.msra.mxu0 0.0
    %387 = vmatprep.subr.mxu0 0.0
    %388 = vmatpush1.msra.mxu0 0.0
    %389 = vmatprep.subr.mxu0 0.0
    %390 = vmatpush1.msra.mxu0 0.0
    %391 = vmatprep.subr.mxu0 0.0
    %392 = vmatpush1.msra.mxu0 0.0
    %393 = vmatprep.subr.mxu0 0.0
    %394 = vmatpush1.msra.mxu0 0.0
    %395 = vmatprep.subr.mxu0 0.0
    %396 = vmatpush1.msra.mxu0 0.0
    %397 = vmatprep.subr.mxu0 0.0
    %398 = vmatpush1.msra.mxu0 0.0
    %399 = vmatprep.subr.mxu0 0.0
    %400 = vmatpush1.msra.mxu0 0.0
    %401 = vmatprep.subr.mxu0 0.0
    %402 = vmatpush1.msra.mxu0 0.0
    %403 = vmatprep.mubr.f32.mxu0 0.0
    %404 = vmatmul.mubr.f32.gmra.mrb[0].mxu0 %v172
    %v405 = vpop.f32.mrb[0].mxu0
    %v406 = vadd.f32 0.0, %v405
    %v407 = vpop.f32.mrb[0].mxu0
    %408 = vdwg.mxu0
    %409 = vmatprep.subr.mxu0 0.0
    %410 = vmatpush1.msra.mxu0 %v331
    %411 = vmatprep.subr.mxu0 0.0
    %412 = vmatpush1.msra.mxu0 %v332
    %413 = vmatprep.subr.mxu0 0.0
    %414 = vmatpush1.msra.mxu0 %v333
    %415 = vmatprep.subr.mxu0 0.0
    %416 = vmatpush1.msra.mxu0 %v334
    %417 = vmatprep.subr.mxu0 0.0
    %418 = vmatpush1.msra.mxu0 0.0
    %419 = vmatprep.subr.mxu0 0.0
    %420 = vmatpush1.msra.mxu0 0.0
    %421 = vmatprep.subr.mxu0 0.0
    %422 = vmatpush1.msra.mxu0 0.0
    %423 = vmatprep.subr.mxu0 0.0
    %424 = vmatpush1.msra.mxu0 0.0
    %425 = vmatprep.subr.mxu0 0.0
    %426 = vmatpush1.msra.mxu0 0.0
    %427 = vmatprep.subr.mxu0 0.0
    %428 = vmatpush1.msra.mxu0 0.0
    %429 = vmatprep.subr.mxu0 0.0
    %430 = vmatpush1.msra.mxu0 0.0
    %431 = vmatprep.subr.mxu0 0.0
    %432 = vmatpush1.msra.mxu0 0.0
    %433 = vmatprep.subr.mxu0 0.0
    %434 = vmatpush1.msra.mxu0 0.0
    %435 = vmatprep.subr.mxu0 0.0
    %436 = vmatpush1.msra.mxu0 0.0
    %437 = vmatprep.subr.mxu0 0.0
    %438 = vmatpush1.msra.mxu0 0.0
    %439 = vmatprep.subr.mxu0 0.0
    %440 = vmatpush1.msra.mxu0 0.0
    %441 = vmatprep.subr.mxu0 0.0
    %442 = vmatpush1.msra.mxu0 0.0
    %443 = vmatprep.subr.mxu0 0.0
    %444 = vmatpush1.msra.mxu0 0.0
    %445 = vmatprep.subr.mxu0 0.0
    %446 = vmatpush1.msra.mxu0 0.0
    %447 = vmatprep.subr.mxu0 0.0
    %448 = vmatpush1.msra.mxu0 0.0
    %449 = vmatprep.subr.mxu0 0.0
    %450 = vmatpush1.msra.mxu0 0.0
    %451 = vmatprep.subr.mxu0 0.0
    %452 = vmatpush1.msra.mxu0 0.0
    %453 = vmatprep.subr.mxu0 0.0
    %454 = vmatpush1.msra.mxu0 0.0
    %455 = vmatprep.subr.mxu0 0.0
    %456 = vmatpush1.msra.mxu0 0.0
    %457 = vmatprep.subr.mxu0 0.0
    %458 = vmatpush1.msra.mxu0 0.0
    %459 = vmatprep.subr.mxu0 0.0
    %460 = vmatpush1.msra.mxu0 0.0
    %461 = vmatprep.subr.mxu0 0.0
    %462 = vmatpush1.msra.mxu0 0.0
    %463 = vmatprep.subr.mxu0 0.0
    %464 = vmatpush1.msra.mxu0 0.0
    %465 = vmatprep.subr.mxu0 0.0
    %466 = vmatpush1.msra.mxu0 0.0
    %467 = vmatprep.subr.mxu0 0.0
    %468 = vmatpush1.msra.mxu0 0.0
    %469 = vmatprep.subr.mxu0 0.0
    %470 = vmatpush1.msra.mxu0 0.0
    %471 = vmatprep.subr.mxu0 0.0
    %472 = vmatpush1.msra.mxu0 0.0
    %473 = vmatprep.mubr.f32.mxu0 0.0
    %474 = vmatmul.mubr.f32.gmra.mrb[0].mxu0 %v245
    %v475 = vpop.f32.mrb[0].mxu0
    %v476 = vadd.f32 %v406, %v475
    %v477 = vpop.f32.mrb[0].mxu0
    %478 = vdwg.mxu0
    %v479 = vld [vmem:[%s9] sm:$0x1]
    %v481 = vlaneseq
    %v482 = vshrl.u32 %v481, 7
    %v483 = vsub.s32 0, %v482
    %v484 = vrot.slane %v479, %v483
    %v486 = vadd.f32 %v476, %v484
    %v487 = vxor.u32 %v486, 2147483648
    %v488 = vmul.f32 %v487, 1.442695
    %v489 = vpow.pop %v488
    %v490 = vadd.f32 %v489, 1.0
    %v491 = vrcp.pop %v490
    %v492 = vmul.f32 1.0, %v491
    %v493 = vld [vmem:[#allocation14] sm:$0xff]
    %v494 = vld [vmem:[#allocation14 + $0x8] sm:$0xff]
    %v495 = vld [vmem:[#allocation14 + $0x10] sm:$0xff]
    %v496 = vld [vmem:[#allocation14 + $0x18] sm:$0xff]
    %v497 = vmul.f32 %v160, %v492
    %v498 = vld [vmem:[#allocation15] sm:$0xff]
    %v499 = vld [vmem:[#allocation15 + $0x8] sm:$0xff]
    %v500 = vld [vmem:[#allocation15 + $0x10] sm:$0xff]
    %v501 = vld [vmem:[#allocation15 + $0x18] sm:$0xff]
    %v503 = vsel %vm170, %v497, 0
    %505 = vmatprep.subr.mxu0 0.0
    %506 = vmatpush1.msra.mxu0 %v498
    %507 = vmatprep.subr.mxu0 0.0
    %508 = vmatpush1.msra.mxu0 %v499
    %509 = vmatprep.subr.mxu0 0.0
    %510 = vmatpush1.msra.mxu0 %v500
    %511 = vmatprep.subr.mxu0 0.0
    %512 = vmatpush1.msra.mxu0 %v501
    %513 = vmatprep.subr.mxu0 0.0
    %514 = vmatpush1.msra.mxu0 0.0
    %515 = vmatprep.subr.mxu0 0.0
    %516 = vmatpush1.msra.mxu0 0.0
    %517 = vmatprep.subr.mxu0 0.0
    %518 = vmatpush1.msra.mxu0 0.0
    %519 = vmatprep.subr.mxu0 0.0
    %520 = vmatpush1.msra.mxu0 0.0
    %521 = vmatprep.subr.mxu0 0.0
    %522 = vmatpush1.msra.mxu0 0.0
    %523 = vmatprep.subr.mxu0 0.0
    %524 = vmatpush1.msra.mxu0 0.0
    %525 = vmatprep.subr.mxu0 0.0
    %526 = vmatpush1.msra.mxu0 0.0
    %527 = vmatprep.subr.mxu0 0.0
    %528 = vmatpush1.msra.mxu0 0.0
    %529 = vmatprep.subr.mxu0 0.0
    %530 = vmatpush1.msra.mxu0 0.0
    %531 = vmatprep.subr.mxu0 0.0
    %532 = vmatpush1.msra.mxu0 0.0
    %533 = vmatprep.subr.mxu0 0.0
    %534 = vmatpush1.msra.mxu0 0.0
    %535 = vmatprep.subr.mxu0 0.0
    %536 = vmatpush1.msra.mxu0 0.0
    %537 = vmatprep.subr.mxu0 0.0
    %538 = vmatpush1.msra.mxu0 0.0
    %539 = vmatprep.subr.mxu0 0.0
    %540 = vmatpush1.msra.mxu0 0.0
    %541 = vmatprep.subr.mxu0 0.0
    %542 = vmatpush1.msra.mxu0 0.0
    %543 = vmatprep.subr.mxu0 0.0
    %544 = vmatpush1.msra.mxu0 0.0
    %545 = vmatprep.subr.mxu0 0.0
    %546 = vmatpush1.msra.mxu0 0.0
    %547 = vmatprep.subr.mxu0 0.0
    %548 = vmatpush1.msra.mxu0 0.0
    %549 = vmatprep.subr.mxu0 0.0
    %550 = vmatpush1.msra.mxu0 0.0
    %551 = vmatprep.subr.mxu0 0.0
    %552 = vmatpush1.msra.mxu0 0.0
    %553 = vmatprep.subr.mxu0 0.0
    %554 = vmatpush1.msra.mxu0 0.0
    %555 = vmatprep.subr.mxu0 0.0
    %556 = vmatpush1.msra.mxu0 0.0
    %557 = vmatprep.subr.mxu0 0.0
    %558 = vmatpush1.msra.mxu0 0.0
    %559 = vmatprep.subr.mxu0 0.0
    %560 = vmatpush1.msra.mxu0 0.0
    %561 = vmatprep.subr.mxu0 0.0
    %562 = vmatpush1.msra.mxu0 0.0
    %563 = vmatprep.subr.mxu0 0.0
    %564 = vmatpush1.msra.mxu0 0.0
    %565 = vmatprep.subr.mxu0 0.0
    %566 = vmatpush1.msra.mxu0 0.0
    %567 = vmatprep.subr.mxu0 0.0
    %568 = vmatpush1.msra.mxu0 0.0
    %569 = vmatprep.mubr.f32.mxu0 0.0
    %570 = vmatmul.mubr.f32.gmra.mrb[0].mxu0 %v503
    %v571 = vpop.f32.mrb[0].mxu0
    %v572 = vadd.f32 0.0, %v571
    %v573 = vpop.f32.mrb[0].mxu0
    %574 = vdwg.mxu0
    %575 = vmatprep.subr.mxu0 0.0
    %576 = vmatpush1.msra.mxu0 %v493
    %577 = vmatprep.subr.mxu0 0.0
    %578 = vmatpush1.msra.mxu0 %v494
    %579 = vmatprep.subr.mxu0 0.0
    %580 = vmatpush1.msra.mxu0 %v495
    %581 = vmatprep.subr.mxu0 0.0
    %582 = vmatpush1.msra.mxu0 %v496
    %583 = vmatprep.subr.mxu0 0.0
    %584 = vmatpush1.msra.mxu0 0.0
    %585 = vmatprep.subr.mxu0 0.0
    %586 = vmatpush1.msra.mxu0 0.0
    %587 = vmatprep.subr.mxu0 0.0
    %588 = vmatpush1.msra.mxu0 0.0
    %589 = vmatprep.subr.mxu0 0.0
    %590 = vmatpush1.msra.mxu0 0.0
    %591 = vmatprep.subr.mxu0 0.0
    %592 = vmatpush1.msra.mxu0 0.0
    %593 = vmatprep.subr.mxu0 0.0
    %594 = vmatpush1.msra.mxu0 0.0
    %595 = vmatprep.subr.mxu0 0.0
    %596 = vmatpush1.msra.mxu0 0.0
    %597 = vmatprep.subr.mxu0 0.0
    %598 = vmatpush1.msra.mxu0 0.0
    %599 = vmatprep.subr.mxu0 0.0
    %600 = vmatpush1.msra.mxu0 0.0
    %601 = vmatprep.subr.mxu0 0.0
    %602 = vmatpush1.msra.mxu0 0.0
    %603 = vmatprep.subr.mxu0 0.0
    %604 = vmatpush1.msra.mxu0 0.0
    %605 = vmatprep.subr.mxu0 0.0
    %606 = vmatpush1.msra.mxu0 0.0
    %607 = vmatprep.subr.mxu0 0.0
    %608 = vmatpush1.msra.mxu0 0.0
    %609 = vmatprep.subr.mxu0 0.0
    %610 = vmatpush1.msra.mxu0 0.0
    %611 = vmatprep.subr.mxu0 0.0
    %612 = vmatpush1.msra.mxu0 0.0
    %613 = vmatprep.subr.mxu0 0.0
    %614 = vmatpush1.msra.mxu0 0.0
    %615 = vmatprep.subr.mxu0 0.0
    %616 = vmatpush1.msra.mxu0 0.0
    %617 = vmatprep.subr.mxu0 0.0
    %618 = vmatpush1.msra.mxu0 0.0
    %619 = vmatprep.subr.mxu0 0.0
    %620 = vmatpush1.msra.mxu0 0.0
    %621 = vmatprep.subr.mxu0 0.0
    %622 = vmatpush1.msra.mxu0 0.0
    %623 = vmatprep.subr.mxu0 0.0
    %624 = vmatpush1.msra.mxu0 0.0
    %625 = vmatprep.subr.mxu0 0.0
    %626 = vmatpush1.msra.mxu0 0.0
    %627 = vmatprep.subr.mxu0 0.0
    %628 = vmatpush1.msra.mxu0 0.0
    %629 = vmatprep.subr.mxu0 0.0
    %630 = vmatpush1.msra.mxu0 0.0
    %631 = vmatprep.subr.mxu0 0.0
    %632 = vmatpush1.msra.mxu0 0.0
    %633 = vmatprep.subr.mxu0 0.0
    %634 = vmatpush1.msra.mxu0 0.0
    %635 = vmatprep.subr.mxu0 0.0
    %636 = vmatpush1.msra.mxu0 0.0
    %637 = vmatprep.subr.mxu0 0.0
    %638 = vmatpush1.msra.mxu0 0.0
    %639 = vmatprep.mubr.f32.mxu0 0.0
    %640 = vmatmul.mubr.f32.gmra.mrb[0].mxu0 %v245
    %v641 = vpop.f32.mrb[0].mxu0
    %v642 = vadd.f32 %v572, %v641
    %v643 = vpop.f32.mrb[0].mxu0
    %644 = vdwg.mxu0
    %v645 = vld [vmem:[%s10] sm:$0x1]
    %v647 = vlaneseq
    %v648 = vshrl.u32 %v647, 7
    %v649 = vsub.s32 0, %v648
    %v650 = vrot.slane %v645, %v649
    %v652 = vadd.f32 %v642, %v650
    %v653 = vtanh.pop %v652
    %v654 = vsub.f32 %v653, %v160
    %v655 = vmul.f32 %v330, %v654
    %v656 = vadd.f32 %v160, %v655
    %657 = vst.msk [vmem:[#allocation2] sm:$0xff] %vm170, %v656
    %v658 = vld [vmem:[%s11] sm:$0xff]
    %v659 = vld [vmem:[%s11 + $0x8] sm:$0xff]
    %v660 = vld [vmem:[%s11 + $0x10] sm:$0xff]
    %v661 = vld [vmem:[%s11 + $0x18] sm:$0xff]
    %v662 = vld [vmem:[%s12] sm:$0x1]
    %v664 = vlaneseq
    %v665 = vshrl.u32 %v664, 7
    %v666 = vsub.s32 0, %v665
    %v667 = vrot.slane %v662, %v666
    %v670 = vsel %vm170, %v656, 0
    %672 = vmatprep.subr.mxu0 0.0
    %673 = vmatpush1.msra.mxu0 %v658
    %674 = vmatprep.subr.mxu0 0.0
    %675 = vmatpush1.msra.mxu0 %v659
    %676 = vmatprep.subr.mxu0 0.0
    %677 = vmatpush1.msra.mxu0 %v660
    %678 = vmatprep.subr.mxu0 0.0
    %679 = vmatpush1.msra.mxu0 %v661
    %680 = vmatprep.subr.mxu0 0.0
    %681 = vmatpush1.msra.mxu0 0.0
    %682 = vmatprep.subr.mxu0 0.0
    %683 = vmatpush1.msra.mxu0 0.0
    %684 = vmatprep.subr.mxu0 0.0
    %685 = vmatpush1.msra.mxu0 0.0
    %686 = vmatprep.subr.mxu0 0.0
    %687 = vmatpush1.msra.mxu0 0.0
    %688 = vmatprep.subr.mxu0 0.0
    %689 = vmatpush1.msra.mxu0 0.0
    %690 = vmatprep.subr.mxu0 0.0
    %691 = vmatpush1.msra.mxu0 0.0
    %692 = vmatprep.subr.mxu0 0.0
    %693 = vmatpush1.msra.mxu0 0.0
    %694 = vmatprep.subr.mxu0 0.0
    %695 = vmatpush1.msra.mxu0 0.0
    %696 = vmatprep.subr.mxu0 0.0
    %697 = vmatpush1.msra.mxu0 0.0
    %698 = vmatprep.subr.mxu0 0.0
    %699 = vmatpush1.msra.mxu0 0.0
    %700 = vmatprep.subr.mxu0 0.0
    %701 = vmatpush1.msra.mxu0 0.0
    %702 = vmatprep.subr.mxu0 0.0
    %703 = vmatpush1.msra.mxu0 0.0
    %704 = vmatprep.subr.mxu0 0.0
    %705 = vmatpush1.msra.mxu0 0.0
    %706 = vmatprep.subr.mxu0 0.0
    %707 = vmatpush1.msra.mxu0 0.0
    %708 = vmatprep.subr.mxu0 0.0
    %709 = vmatpush1.msra.mxu0 0.0
    %710 = vmatprep.subr.mxu0 0.0
    %711 = vmatpush1.msra.mxu0 0.0
    %712 = vmatprep.subr.mxu0 0.0
    %713 = vmatpush1.msra.mxu0 0.0
    %714 = vmatprep.subr.mxu0 0.0
    %715 = vmatpush1.msra.mxu0 0.0
    %716 = vmatprep.subr.mxu0 0.0
    %717 = vmatpush1.msra.mxu0 0.0
    %718 = vmatprep.subr.mxu0 0.0
    %719 = vmatpush1.msra.mxu0 0.0
    %720 = vmatprep.subr.mxu0 0.0
    %721 = vmatpush1.msra.mxu0 0.0
    %722 = vmatprep.subr.mxu0 0.0
    %723 = vmatpush1.msra.mxu0 0.0
    %724 = vmatprep.subr.mxu0 0.0
    %725 = vmatpush1.msra.mxu0 0.0
    %726 = vmatprep.subr.mxu0 0.0
    %727 = vmatpush1.msra.mxu0 0.0
    %728 = vmatprep.subr.mxu0 0.0
    %729 = vmatpush1.msra.mxu0 0.0
    %730 = vmatprep.subr.mxu0 0.0
    %731 = vmatpush1.msra.mxu0 0.0
    %732 = vmatprep.subr.mxu0 0.0
    %733 = vmatpush1.msra.mxu0 0.0
    %734 = vmatprep.subr.mxu0 0.0
    %735 = vmatpush1.msra.mxu0 0.0
    %736 = vmatprep.mubr.f32.mxu0 0.0
    %737 = vmatmul.mubr.f32.gmra.mrb[0].mxu0 %v670
    %v738 = vpop.f32.mrb[0].mxu0
    %v739 = vadd.f32 %v667, %v738
    %v740 = vpop.f32.mrb[0].mxu0
    %741 = vdwg.mxu0
    %v742 = vtanh.pop %v739
    %743 = vst.msk [vmem:[#allocation17] sm:$0xff] %vm170, %v742
    %744 = vst.msk [vmem:[#allocation18] sm:$0xff] %vm170, %v656
    // Predicated region
    $region90: #{tpu_custom_call.1} parent=1 // pred_check
      _
    $region91: #{tpu_custom_call.1} parent=1 // pred_check_branch
      %746 = sbr.rel (0) target = $region93
    $region92: #{tpu_custom_call.1} parent=1 // pred_region
      %s748 = ssub.s32 128, 128
      %749 = vsyncadd [#allocation5], %s748
      %s751 = sshll.u32 [#allocation17], 4
      %s752 = int_to_ptr.vmem [resolvable:$true] %s751
      %754 = dma.vmem_to_hbm [thread:$0]  %s752, 128, %s13, [#allocation5]
    $region93: #{tpu_custom_call.1} parent=1 // pred_fallthru
      _
    // Predicated region
    $region94: #{tpu_custom_call.1} parent=1 // pred_check
      _
    $region95: #{tpu_custom_call.1} parent=1 // pred_check_branch
      %756 = sbr.rel (0) target = $region97
    $region96: #{tpu_custom_call.1} parent=1 // pred_region
      %s758 = ssub.s32 128, 128
      %759 = vsyncadd [#allocation19], %s758
      %s761 = sshll.u32 [#allocation18], 4
      %s762 = int_to_ptr.vmem [resolvable:$true] %s761
      %764 = dma.vmem_to_hbm [thread:$0]  %s762, 128, %s14, [#allocation19]
    $region97: #{tpu_custom_call.1} parent=1 // pred_fallthru
      _
    // Predicated region
    $region98: #{tpu_custom_call.1} parent=1 // pred_check
      _
    $region99: #{tpu_custom_call.1} parent=1 // pred_check_branch
      %766 = sbr.rel (0) target = $region101
    $region100: #{tpu_custom_call.1} parent=1 // pred_region
      %767 = dma.done [#allocation5], 128
    $region101: #{tpu_custom_call.1} parent=1 // pred_fallthru
      _
    // Predicated region
    $region102: #{tpu_custom_call.1} parent=1 // pred_check
      _
    $region103: #{tpu_custom_call.1} parent=1 // pred_check_branch
      %769 = sbr.rel (0) target = $region105
    $region104: #{tpu_custom_call.1} parent=1 // pred_region
      %770 = dma.done [#allocation19], 128
    $region105: #{tpu_custom_call.1} parent=1 // pred_fallthru
      _
    %771 = vsyncpa [#allocation4], 1
    %772 = vsyncpa [#allocation7], 1
    %773 = vsyncpa [#allocation10], 1
    %774 = vsyncpa [#allocation13], 1
    %775 = vsyncpa [#allocation16], 1
    %776 = vsyncpa [#allocation5], 1
    %777 = vsyncpa [#allocation19], 1

</llo_original>
